<compile_context>
chip_gen: v6e
topology: v6e:2x2x1
jax: 0.10.0
libtpu: 0.0.40
codegen_flags: <defaults>
</compile_context>

<pallas_src>
import jax
import jax.numpy as jnp
from jax.experimental import pallas as pl
from jax.experimental.pallas import tpu as pltpu


def _mish_kernel(x_ref, o_ref):
    x = x_ref[...].astype(jnp.float32)
    t = jnp.exp(-jnp.abs(x))          # single EUP transcendental per element
    tt = t * t
    pos = x >= 0.0
    num = jnp.where(pos, 1.0 + 2.0 * t, tt + 2.0 * t)
    den = jnp.where(pos, 1.0 + 2.0 * t + 2.0 * tt, tt + 2.0 * t + 2.0)
    # approx reciprocal on the EUP (free slot), then two Newton-Raphson
    # refinement steps on the VPU to restore full f32 precision.
    r = pl.reciprocal(den, approx=True)
    r = r * (2.0 - den * r)
    r = r * (2.0 - den * r)
    o_ref[...] = (x * num * r).astype(o_ref.dtype)


def _mish_jnp(x):
    """Plain-JAX fallback for tiny ragged tails (< 128 elements)."""
    xf = x.astype(jnp.float32)
    return (xf * jnp.tanh(jax.nn.softplus(xf))).astype(x.dtype)


# ~4 MiB per block -> (2 in + 2 out) double buffers = 16 MiB of VMEM.
_TARGET_BLOCK_BYTES = 4 * 1024 * 1024
_MIN_SPLIT_BYTES = 2 * 1024 * 1024  # above this, keep >= ~4 grid steps


def _mish_2d(x2d):
    rows, lanes = x2d.shape
    dtype = x2d.dtype
    itemsize = jnp.dtype(dtype).itemsize
    # dtype-aware sublane tile: 8 (f32/i32), 16 (bf16/f16), 32 (i8/fp8)
    sub = 8 * max(1, 4 // itemsize)

    block_rows = max(sub, (_TARGET_BLOCK_BYTES // (lanes * itemsize)) // sub * sub)

    total_bytes = rows * lanes * itemsize
    if total_bytes > _MIN_SPLIT_BYTES:
        # Keep at least ~4 grid steps: both v7x TCs get work (grid axis is
        # "parallel") and DMA/compute overlap is preserved.
        quarter = -(-rows // 4)
        quarter = -(-quarter // sub) * sub
        block_rows = min(block_rows, max(sub, quarter))

    if block_rows >= rows:
        # Single full-extent block; full-dim blocks are exempt from the
        # (sub, 128) divisibility rule.
        block_rows = rows

    grid = (pl.cdiv(rows, block_rows),)  # ragged final block is masked by Pallas

    return pl.pallas_call(
        _mish_kernel,
        out_shape=jax.ShapeDtypeStruct((rows, lanes), dtype),
        grid_spec=pltpu.PrefetchScalarGridSpec(
            num_scalar_prefetch=0,
            grid=grid,
            in_specs=[pl.BlockSpec((block_rows, lanes), lambda i: (i, 0))],
            out_specs=pl.BlockSpec((block_rows, lanes), lambda i: (i, 0)),
        ),
        compiler_params=pltpu.CompilerParams(
            dimension_semantics=("parallel",),
            vmem_limit_bytes=32 * 1024 * 1024,
        ),
    )(x2d)


def mish(x):
    """Applies mish(x) = x * tanh(softplus(x)) element-wise. Any shape/dtype."""
    # TODO(synk): PyTorch's inplace=True mutation has no JAX equivalent; this
    # always returns a new array with identical values.
    orig_shape = x.shape
    n = x.size
    if n == 0:
        return x

    x_flat = jnp.ravel(x)

    lanes = None
    for cand in (8192, 4096, 2048, 1024, 512, 256, 128):
        if n % cand == 0:
            lanes = cand
            break

    if lanes is not None:
        out = _mish_2d(x_flat.reshape(n // lanes, lanes))
        return out.reshape(orig_shape)

    # Ragged fallback (n % 128 != 0): run the kernel on the lane-aligned
    # prefix and handle the < 128-element tail with plain jnp. Avoids the
    # extra full-array pad + slice HBM passes of the previous version.
    lanes = 128
    head = (n // lanes) * lanes
    tail_out = _mish_jnp(x_flat[head:])
    if head == 0:
        return tail_out.reshape(orig_shape)
    head_out = _mish_2d(x_flat[:head].reshape(head // lanes, lanes))
    return jnp.concatenate([head_out.reshape(-1), tail_out]).reshape(orig_shape)


def _mish_ref(x):
    xf = x.astype(jnp.float32)
    return (xf * jnp.tanh(jax.nn.softplus(xf))).astype(x.dtype)


if __name__ == "__main__":
    key = jax.random.PRNGKey(0)

    # Main case: shape implied by the module (N, C, H, W) = (2, 4, 16, 16).
    x = jax.random.normal(key, (2, 4, 16, 16), dtype=jnp.float32) * 4.0
    y = mish(x)
    jax.block_until_ready(y)
    y_ref = _mish_ref(x)
    assert y.shape == x.shape and y.dtype == x.dtype
    assert jnp.allclose(y, y_ref, atol=1e-5, rtol=1e-5)

    # Ragged shape with a lane-aligned prefix + <128-element tail.
    x2 = jax.random.normal(jax.random.PRNGKey(1), (5, 131), dtype=jnp.float32) * 4.0
    y2 = mish(x2)
    jax.block_until_ready(y2)
    assert jnp.allclose(y2, _mish_ref(x2), atol=1e-5, rtol=1e-5)

    # Tiny ragged shape (< 128 elements, pure jnp tail path).
    x3 = jax.random.normal(jax.random.PRNGKey(2), (3, 5, 7), dtype=jnp.float32)
    y3 = mish(x3)
    jax.block_until_ready(y3)
    assert jnp.allclose(y3, _mish_ref(x3), atol=1e-5, rtol=1e-5)

    # bf16 input (exercises dtype-aware sublane rounding; compute stays f32).
    x4 = jax.random.normal(jax.random.PRNGKey(3), (4, 256), dtype=jnp.bfloat16)
    y4 = mish(x4)
    jax.block_until_ready(y4)
    assert jnp.allclose(y4.astype(jnp.float32),
                        _mish_ref(x4).astype(jnp.float32), atol=2e-2, rtol=2e-2)

    print("KERNEL_OK")
</pallas_src>

<mosaic_0001>
module attributes {stable_mosaic.version = 11 : i64} {
  func.func @_mish_kernel(%arg0: i32, %arg1: memref<1x2048xf32, #tpu.memory_space<vmem>>, %arg2: memref<1x2048xf32, #tpu.memory_space<vmem>>) attributes {dimension_semantics = [#tpu.dimension_semantics<parallel>], iteration_bounds = array<i64: 1>, scalar_prefetch = 0 : i64, scratch_operands = 0 : i64, tpu.core_type = #tpu.core_type<tc>, window_params = [{transform_indices = @transform_0, window_bounds = array<i64: 1, 2048>}, {transform_indices = @transform_1, window_bounds = array<i64: 1, 2048>}]} {
    %c0 = arith.constant 0 : index
    %c0_0 = arith.constant 0 : index
    %0 = vector.load %arg1[%c0, %c0_0] : memref<1x2048xf32, #tpu.memory_space<vmem>>, vector<1x2048xf32>
    %1 = math.absf %0 : vector<1x2048xf32>
    %cst = arith.constant 0.000000e+00 : f32
    %2 = vector.broadcast %cst : f32 to vector<1x2048xf32>
    %3 = arith.subf %2, %1 : vector<1x2048xf32>
    %4 = math.exp %3 : vector<1x2048xf32>
    %5 = arith.mulf %4, %4 : vector<1x2048xf32>
    %cst_1 = arith.constant 0.000000e+00 : f32
    %6 = vector.broadcast %cst_1 : f32 to vector<1x2048xf32>
    %7 = arith.cmpf oge, %0, %6 : vector<1x2048xf32>
    %cst_2 = arith.constant 2.000000e+00 : f32
    %8 = vector.broadcast %cst_2 : f32 to vector<1x2048xf32>
    %9 = arith.mulf %8, %4 : vector<1x2048xf32>
    %cst_3 = arith.constant 1.000000e+00 : f32
    %10 = vector.broadcast %cst_3 : f32 to vector<1x2048xf32>
    %11 = arith.addf %10, %9 : vector<1x2048xf32>
    %cst_4 = arith.constant 2.000000e+00 : f32
    %12 = vector.broadcast %cst_4 : f32 to vector<1x2048xf32>
    %13 = arith.mulf %12, %4 : vector<1x2048xf32>
    %14 = arith.addf %5, %13 : vector<1x2048xf32>
    %15 = arith.select %7, %11, %14 : vector<1x2048xi1>, vector<1x2048xf32>
    %cst_5 = arith.constant 2.000000e+00 : f32
    %16 = vector.broadcast %cst_5 : f32 to vector<1x2048xf32>
    %17 = arith.mulf %16, %4 : vector<1x2048xf32>
    %cst_6 = arith.constant 1.000000e+00 : f32
    %18 = vector.broadcast %cst_6 : f32 to vector<1x2048xf32>
    %19 = arith.addf %18, %17 : vector<1x2048xf32>
    %cst_7 = arith.constant 2.000000e+00 : f32
    %20 = vector.broadcast %cst_7 : f32 to vector<1x2048xf32>
    %21 = arith.mulf %20, %5 : vector<1x2048xf32>
    %22 = arith.addf %19, %21 : vector<1x2048xf32>
    %cst_8 = arith.constant 2.000000e+00 : f32
    %23 = vector.broadcast %cst_8 : f32 to vector<1x2048xf32>
    %24 = arith.mulf %23, %4 : vector<1x2048xf32>
    %25 = arith.addf %5, %24 : vector<1x2048xf32>
    %cst_9 = arith.constant 2.000000e+00 : f32
    %26 = vector.broadcast %cst_9 : f32 to vector<1x2048xf32>
    %27 = arith.addf %25, %26 : vector<1x2048xf32>
    %28 = arith.select %7, %22, %27 : vector<1x2048xi1>, vector<1x2048xf32>
    %29 = tpu.reciprocal %28 {approx = true} : vector<1x2048xf32> -> vector<1x2048xf32>
    %30 = arith.mulf %28, %29 : vector<1x2048xf32>
    %cst_10 = arith.constant 2.000000e+00 : f32
    %31 = vector.broadcast %cst_10 : f32 to vector<1x2048xf32>
    %32 = arith.subf %31, %30 : vector<1x2048xf32>
    %33 = arith.mulf %29, %32 : vector<1x2048xf32>
    %34 = arith.mulf %28, %33 : vector<1x2048xf32>
    %cst_11 = arith.constant 2.000000e+00 : f32
    %35 = vector.broadcast %cst_11 : f32 to vector<1x2048xf32>
    %36 = arith.subf %35, %34 : vector<1x2048xf32>
    %37 = arith.mulf %33, %36 : vector<1x2048xf32>
    %38 = arith.mulf %0, %15 : vector<1x2048xf32>
    %39 = arith.mulf %38, %37 : vector<1x2048xf32>
    %c0_12 = arith.constant 0 : index
    %c0_13 = arith.constant 0 : index
    %40 = vector.load %arg2[%c0_12, %c0_13] : memref<1x2048xf32, #tpu.memory_space<vmem>>, vector<1x2048xf32>
    tpu.vector_store %arg2[%c0_12, %c0_13], %39 {strides = array<i32>} : memref<1x2048xf32, #tpu.memory_space<vmem>>, vector<1x2048xf32>,
    return
  }
  func.func @transform_0(%arg0: i32) -> (i32, i32) {
    %c0_i32 = arith.constant 0 : i32
    %c0_i32_0 = arith.constant 0 : i32
    return %arg0, %c0_i32 : i32, i32
  }
  func.func @transform_1(%arg0: i32) -> (i32, i32) {
    %c0_i32 = arith.constant 0 : i32
    %c0_i32_0 = arith.constant 0 : i32
    return %arg0, %c0_i32 : i32, i32
  }
}

</mosaic_0001>

<llo_original>
// kernel: tpu_custom_call.1
$region0: #{tpu_custom_call.1}
  #allocation0 [shape = 'u32[]', space=smem, size = 0x4, offset = 0x4, fixed_abs, tag = 'smem constant byte address 0x4 - core index']
  #allocation1 [shape = 'u32[144,128]{1,0:T(1,128)}', space=vmem, size = 0x12000, scoped, tag = 'internal scratch']
  %s0 = inlined_call_operand.hbm [shape: f32[1,2048], index: 0, kind: input, shape index: {}]
  %s1 = inlined_call_operand.hbm [shape: f32[1,2048], index: 1, kind: output, shape index: {}]
  %s2 = sld [smem:[#allocation0]]
  $region18: #{tpu_custom_call.1} parent=0
    _
  %s4 = ssub.s32 1, %s2
  %s5 = scalar_select 0, %s4, %s2
  $region1: #{tpu_custom_call.1} parent=0
    #allocation2 [shape = 'u8[8192]{0}', space=vmem, size = 0x2000, scoped, tag = 'input window, operand 0, single buffered']
    #allocation3 [shape = 's32[1]{0}', space=sflag, size = 0x4, scoped, tag = 'scoped memory for tpu_custom_call.1']
    #allocation4 [shape = 's32[1]{0}', space=sflag, size = 0x4, scoped, tag = 'scoped memory for tpu_custom_call.1']
    #allocation5 [shape = 'u8[8192]{0}', space=vmem, size = 0x2000, scoped, tag = 'output window, operand 0, single buffered']
    %6 = vsyncpa [#allocation3], 0
    %7 = vsyncpa [#allocation4], 0
    // Predicated region
    $region2: #{tpu_custom_call.1} parent=1 // pred_check
      _
    $region3: #{tpu_custom_call.1} parent=1 // pred_check_branch
      %9 = sbr.rel (0) target = $region5
    $region4: #{tpu_custom_call.1} parent=1 // pred_region
      %s11 = ssub.s32 256, 256
      %12 = vsyncadd [#allocation3], %s11
      %s14 = sshll.u32 [#allocation2], 4
      %s15 = int_to_ptr.vmem [resolvable:$true] %s14
      %17 = dma.hbm_to_vmem [thread:$0]  %s0, 256, %s15, [#allocation3]
    $region5: #{tpu_custom_call.1} parent=1 // pred_fallthru
      _
    // Predicated region
    $region6: #{tpu_custom_call.1} parent=1 // pred_check
      _
    $region7: #{tpu_custom_call.1} parent=1 // pred_check_branch
      %19 = sbr.rel (0) target = $region9
    $region8: #{tpu_custom_call.1} parent=1 // pred_region
      %20 = dma.done [#allocation3], 256
    $region9: #{tpu_custom_call.1} parent=1 // pred_fallthru
      _
    %v21 = vld [vmem:[#allocation2] sm:$0xff]
    %v22 = vld [vmem:[#allocation2 + $0x8] sm:$0xff]
    %v23 = vand.u32 2147483647, %v21
    %v24 = vand.u32 2147483647, %v22
    %v25 = vsub.f32 0.0, %v23
    %v26 = vsub.f32 0.0, %v24
    %v27 = vmul.f32 %v25, 1.442695
    %v28 = vpow.pop %v27
    %v29 = vmul.f32 %v26, 1.442695
    %v30 = vpow.pop %v29
    %v31 = vmul.f32 %v28, %v28
    %v32 = vmul.f32 %v30, %v30
    %vm33 = vcmp.ge.f32.partialorder %v21, 0.0
    %vm34 = vcmp.ge.f32.partialorder %v22, 0.0
    %v35 = vmul.f32 %v28, 2.0
    %v36 = vmul.f32 %v30, 2.0
    %v37 = vadd.f32 %v35, 1.0
    %v38 = vadd.f32 %v36, 1.0
    %v39 = vadd.f32 %v31, %v35
    %v40 = vadd.f32 %v32, %v36
    %v41 = vsel %vm33, %v37, %v39
    %v42 = vsel %vm34, %v38, %v40
    %v43 = vmul.f32 %v31, 2.0
    %v44 = vmul.f32 %v32, 2.0
    %v45 = vadd.f32 %v37, %v43
    %v46 = vadd.f32 %v38, %v44
    %v47 = vadd.f32 %v39, 2.0
    %v48 = vadd.f32 %v40, 2.0
    %v49 = vsel %vm33, %v45, %v47
    %v50 = vsel %vm34, %v46, %v48
    %v51 = vrcp.pop %v49
    %v52 = vrcp.pop %v50
    %v53 = vmul.f32 %v49, %v51
    %v54 = vmul.f32 %v50, %v52
    %v55 = vsub.f32 2.0, %v53
    %v56 = vsub.f32 2.0, %v54
    %v57 = vmul.f32 %v51, %v55
    %v58 = vmul.f32 %v52, %v56
    %v59 = vmul.f32 %v49, %v57
    %v60 = vmul.f32 %v50, %v58
    %v61 = vsub.f32 2.0, %v59
    %v62 = vsub.f32 2.0, %v60
    %v63 = vmul.f32 %v57, %v61
    %v64 = vmul.f32 %v58, %v62
    %v65 = vmul.f32 %v21, %v41
    %v66 = vmul.f32 %v22, %v42
    %v67 = vmul.f32 %v65, %v63
    %v68 = vmul.f32 %v66, %v64
    %69 = vst [vmem:[#allocation5] sm:$0xff] %v67
    %70 = vst [vmem:[#allocation5 + $0x8] sm:$0xff] %v68
    // Predicated region
    $region10: #{tpu_custom_call.1} parent=1 // pred_check
      _
    $region11: #{tpu_custom_call.1} parent=1 // pred_check_branch
      %72 = sbr.rel (0) target = $region13
    $region12: #{tpu_custom_call.1} parent=1 // pred_region
      %s74 = ssub.s32 256, 256
      %75 = vsyncadd [#allocation4], %s74
      %s77 = sshll.u32 [#allocation5], 4
      %s78 = int_to_ptr.vmem [resolvable:$true] %s77
      %80 = dma.vmem_to_hbm [thread:$0]  %s78, 256, %s1, [#allocation4]
    $region13: #{tpu_custom_call.1} parent=1 // pred_fallthru
      _
    // Predicated region
    $region14: #{tpu_custom_call.1} parent=1 // pred_check
      _
    $region15: #{tpu_custom_call.1} parent=1 // pred_check_branch
      %82 = sbr.rel (0) target = $region17
    $region16: #{tpu_custom_call.1} parent=1 // pred_region
      %83 = dma.done [#allocation4], 256
    $region17: #{tpu_custom_call.1} parent=1 // pred_fallthru
      _
    %84 = vsyncpa [#allocation3], 1
    %85 = vsyncpa [#allocation4], 1

</llo_original>
